<compile_context>
chip_gen: v7x
topology: tpu7x:2x2x1
jax: 0.10.0
libtpu: 0.0.40
codegen_flags: <defaults>
</compile_context>

<pallas_src>
import functools
import math

import jax
import jax.numpy as jnp
from jax.experimental import pallas as pl
from jax.experimental.pallas import tpu as pltpu


# ----------------------------------------------------------------------------
# Tiling / VMEM helpers
# ----------------------------------------------------------------------------
def _pick_tile(dim, target, step):
    """Largest tile <= target that divides dim (multiple of `step`), else dim."""
    if dim <= target:
        return dim
    t = (target // step) * step
    while t >= step:
        if dim % t == 0:
            return t
        t -= step
    return dim


def _vmem_limit(block_bytes, scratch_bytes=0):
    """Scoped-VMEM limit from the double-buffered block footprint (+headroom)."""
    fp = 2 * sum(block_bytes) + scratch_bytes
    return int(min(max(fp + (4 << 20), 16 << 20), 64 << 20))


# ----------------------------------------------------------------------------
# Tiled GEMM: y = x @ w + b   (optional ReLU epilogue)
# ----------------------------------------------------------------------------
def _matmul_kernel(x_ref, w_ref, b_ref, o_ref, acc_ref, *, activation):
    k = pl.program_id(2)

    @pl.when(k == 0)
    def _():
        acc_ref[...] = jnp.zeros_like(acc_ref)

    acc_ref[...] += jnp.dot(
        x_ref[...], w_ref[...], preferred_element_type=jnp.float32
    )

    @pl.when(k == pl.num_programs(2) - 1)
    def _():
        y = acc_ref[...] + b_ref[...]
        if activation == "relu":
            y = jnp.maximum(y, 0.0)
        o_ref[...] = y.astype(o_ref.dtype)


def linear(x, w, b, activation=None, out_dtype=None, tm=512, tn=512, tk=512):
    """Tiled, pipelined GEMM with bias (+ optional ReLU) epilogue."""
    M, K = x.shape
    _, N = w.shape
    out_dtype = out_dtype or x.dtype
    tm = _pick_tile(M, tm, 16)          # 16: bf16 sublane packing on writeback
    tn = _pick_tile(N, tn, 128)
    tk = _pick_tile(K, tk, 128)
    grid = (M // tm, N // tn, K // tk)
    b2 = b.reshape(1, N).astype(jnp.float32)

    out_isz = jnp.dtype(out_dtype).itemsize
    block_bytes = [
        tm * tk * x.dtype.itemsize,
        tk * tn * w.dtype.itemsize,
        tn * 4,
        tm * tn * out_isz,
    ]
    vmem = _vmem_limit(block_bytes, scratch_bytes=tm * tn * 4)

    kernel = functools.partial(_matmul_kernel, activation=activation)
    return pl.pallas_call(
        kernel,
        out_shape=jax.ShapeDtypeStruct((M, N), out_dtype),
        grid_spec=pltpu.PrefetchScalarGridSpec(
            num_scalar_prefetch=0,
            grid=grid,
            in_specs=[
                pl.BlockSpec((tm, tk), lambda i, j, k: (i, k)),
                pl.BlockSpec((tk, tn), lambda i, j, k: (k, j)),
                pl.BlockSpec((1, tn), lambda i, j, k: (0, j)),
            ],
            out_specs=pl.BlockSpec((tm, tn), lambda i, j, k: (i, j)),
            scratch_shapes=[pltpu.VMEM((tm, tn), jnp.float32)],
        ),
        compiler_params=pltpu.CompilerParams(
            dimension_semantics=("parallel", "parallel", "arbitrary"),
            vmem_limit_bytes=vmem,
        ),
    )(x, w, b2)


# ----------------------------------------------------------------------------
# Tiled GEMM with fused residual-add + LayerNorm epilogue:
#   y = LayerNorm(residual + x @ w + b) * gamma + beta
# (full feature dim N kept per block so the LN reduction stays in-kernel)
# ----------------------------------------------------------------------------
def _matmul_res_ln_kernel(x_ref, w_ref, b_ref, r_ref, g_ref, bt_ref,
                          o_ref, acc_ref, *, eps):
    k = pl.program_id(1)

    @pl.when(k == 0)
    def _():
        acc_ref[...] = jnp.zeros_like(acc_ref)

    acc_ref[...] += jnp.dot(
        x_ref[...], w_ref[...], preferred_element_type=jnp.float32
    )

    @pl.when(k == pl.num_programs(1) - 1)
    def _():
        y = acc_ref[...] + b_ref[...] + r_ref[...].astype(jnp.float32)
        mean = jnp.mean(y, axis=-1, keepdims=True)
        var = jnp.mean((y - mean) ** 2, axis=-1, keepdims=True)
        yn = (y - mean) * jax.lax.rsqrt(var + eps)
        o_ref[...] = (yn * g_ref[...] + bt_ref[...]).astype(o_ref.dtype)


def _ln_gemm_tiles(M, K, N, budget=20 << 20):
    """Pick (tm, tk) so the full-N footprint of the LN-fused GEMM fits budget."""
    candidates = ((256, 512), (128, 512), (128, 256), (64, 256),
                  (64, 128), (32, 128), (16, 128))
    best = None
    for tm_t, tk_t in candidates:
        tm = _pick_tile(M, tm_t, 16)
        tk = _pick_tile(K, tk_t, 128)
        fp = (2 * (tm * tk * 2 + tk * N * 2 + 3 * N * 4 + tm * N * 2)
              + 2 * tm * N * 2 + tm * N * 4)
        if best is None or fp < best[2]:
            best = (tm, tk, fp)
        if fp <= budget:
            return tm, tk, fp
    return best


def linear_residual_layernorm(x, w, b, residual, gamma, beta,
                              out_dtype=jnp.bfloat16):
    M, K = x.shape
    _, N = w.shape
    tm, tk, fp = _ln_gemm_tiles(M, K, N)
    grid = (M // tm, K // tk)
    b2 = b.reshape(1, N).astype(jnp.float32)
    g2 = gamma.reshape(1, N).astype(jnp.float32)
    bt2 = beta.reshape(1, N).astype(jnp.float32)
    vmem = _vmem_limit([fp // 2], 0)   # fp already counts double-buffering
    return pl.pallas_call(
        functools.partial(_matmul_res_ln_kernel, eps=1e-5),
        out_shape=jax.ShapeDtypeStruct((M, N), out_dtype),
        grid_spec=pltpu.PrefetchScalarGridSpec(
            num_scalar_prefetch=0,
            grid=grid,
            in_specs=[
                pl.BlockSpec((tm, tk), lambda i, k: (i, k)),
                pl.BlockSpec((tk, N), lambda i, k: (k, 0)),
                pl.BlockSpec((1, N), lambda i, k: (0, 0)),
                pl.BlockSpec((tm, N), lambda i, k: (i, 0)),
                pl.BlockSpec((1, N), lambda i, k: (0, 0)),
                pl.BlockSpec((1, N), lambda i, k: (0, 0)),
            ],
            out_specs=pl.BlockSpec((tm, N), lambda i, k: (i, 0)),
            scratch_shapes=[pltpu.VMEM((tm, N), jnp.float32)],
        ),
        compiler_params=pltpu.CompilerParams(
            dimension_semantics=("parallel", "arbitrary"),
            vmem_limit_bytes=vmem,
        ),
    )(x, w, b2, residual, g2, bt2)


# ----------------------------------------------------------------------------
# Flash-style causal multi-head attention.
# grid = (B, H, q_tiles, kv_tiles); KV axis trailing / "arbitrary";
# online-softmax (m, l, acc) in VMEM scratch; fully-masked KV tiles skipped.
# ----------------------------------------------------------------------------
def _flash_attn_kernel(q_ref, k_ref, v_ref, o_ref, m_ref, l_ref, acc_ref,
                       *, scale, tq, tkv):
    qi = pl.program_id(2)
    kj = pl.program_id(3)

    @pl.when(kj == 0)
    def _():
        m_ref[...] = jnp.full(m_ref.shape, -jnp.inf, jnp.float32)
        l_ref[...] = jnp.zeros_like(l_ref)
        acc_ref[...] = jnp.zeros_like(acc_ref)

    # Causal tile skip: only process KV tiles that intersect the lower triangle.
    @pl.when(kj * tkv <= qi * tq + (tq - 1))
    def _():
        s = jax.lax.dot_general(
            q_ref[...], k_ref[...], (((1,), (1,)), ((), ())),
            preferred_element_type=jnp.float32,
        ) * scale
        row = qi * tq + jax.lax.broadcasted_iota(jnp.int32, (tq, tkv), 0)
        col = kj * tkv + jax.lax.broadcasted_iota(jnp.int32, (tq, tkv), 1)
        s = jnp.where(col <= row, s, -1.0e9)     # masked_fill(mask==0, -1e9)

        m_prev = m_ref[...]
        m_new = jnp.maximum(m_prev, jnp.max(s, axis=-1, keepdims=True))
        alpha = jnp.exp(m_prev - m_new)
        p = jnp.exp(s - m_new)
        l_ref[...] = alpha * l_ref[...] + jnp.sum(p, axis=-1, keepdims=True)
        acc_ref[...] = alpha * acc_ref[...] + jnp.dot(
            p.astype(v_ref.dtype), v_ref[...], preferred_element_type=jnp.float32
        )
        m_ref[...] = m_new

    @pl.when(kj == pl.num_programs(3) - 1)
    def _():
        o_ref[...] = (acc_ref[...] *
                      pl.reciprocal(l_ref[...], approx=True)).astype(o_ref.dtype)


def flash_causal_attention(q, k, v, *, tq=256, tkv=256):
    """q, k, v: (B, H, S, d_k) bf16 -> (B, H, S, d_k) bf16."""
    B, H, S, dk = q.shape
    tq = _pick_tile(S, tq, 16)
    tkv = _pick_tile(S, tkv, 128)
    nq, nkv = S // tq, S // tkv

    def q_map(b, h, i, j):
        return (b, h, i, 0)

    def kv_map(b, h, i, j):
        # Clamp to the last KV tile needed for this query tile so skipped
        # (fully masked) grid steps reuse the resident buffer (no fresh DMA).
        last_needed = ((i + 1) * tq - 1) // tkv
        return (b, h, jnp.minimum(j, last_needed), 0)

    block_bytes = [tq * dk * 2, tkv * dk * 2, tkv * dk * 2, tq * dk * 2]
    vmem = _vmem_limit(block_bytes, scratch_bytes=2 * tq * 4 + tq * dk * 4)

    kernel = functools.partial(_flash_attn_kernel, scale=1.0 / math.sqrt(dk),
                               tq=tq, tkv=tkv)
    return pl.pallas_call(
        kernel,
        out_shape=jax.ShapeDtypeStruct((B, H, S, dk), q.dtype),
        grid_spec=pltpu.PrefetchScalarGridSpec(
            num_scalar_prefetch=0,
            grid=(B, H, nq, nkv),
            in_specs=[
                pl.BlockSpec((None, None, tq, dk), q_map),
                pl.BlockSpec((None, None, tkv, dk), kv_map),
                pl.BlockSpec((None, None, tkv, dk), kv_map),
            ],
            out_specs=pl.BlockSpec((None, None, tq, dk), q_map),
            scratch_shapes=[
                pltpu.VMEM((tq, 1), jnp.float32),      # m (running max)
                pltpu.VMEM((tq, 1), jnp.float32),      # l (running denom)
                pltpu.VMEM((tq, dk), jnp.float32),     # acc
            ],
        ),
        compiler_params=pltpu.CompilerParams(
            dimension_semantics=("parallel", "parallel", "parallel", "arbitrary"),
            vmem_limit_bytes=vmem,
        ),
    )(q, k, v)


# ----------------------------------------------------------------------------
# Model glue (plain JAX): embedding lookup, positional encoding
# ----------------------------------------------------------------------------
def positional_encoding(max_len, d_model):
    position = jnp.arange(max_len, dtype=jnp.float32)[:, None]
    div_term = jnp.exp(
        jnp.arange(0, d_model, 2, dtype=jnp.float32) * (-math.log(10000.0) / d_model)
    )
    pe = jnp.zeros((max_len, d_model), dtype=jnp.float32)
    pe = pe.at[:, 0::2].set(jnp.sin(position * div_term))
    pe = pe.at[:, 1::2].set(jnp.cos(position * div_term))
    return pe


def decoder_layer_forward(p, x, num_heads):
    B, S, D = x.shape
    dk = D // num_heads
    xf = x.reshape(B * S, D)                               # bf16

    # Fused QKV projection: one GEMM, activation slab read once.
    qkv = linear(xf, p["wqkv_w"], p["wqkv_b"], out_dtype=jnp.bfloat16)
    # TODO(synk): when d_k is a multiple of 128 the (B,S,3D) slab could be
    # addressed per-head directly via lane-offset index maps; the XLA-side
    # transpose below keeps the small-d_k test shapes layout-legal.
    qkv = qkv.reshape(B, S, 3, num_heads, dk).transpose(2, 0, 3, 1, 4)

    # Flash-style causal MHA on (B, H, S, d_k) blocks.
    attn = flash_causal_attention(qkv[0], qkv[1], qkv[2])
    attn = attn.transpose(0, 2, 1, 3).reshape(B * S, D)    # combine heads

    # x1 = LayerNorm(x + W_O(attn))  -- fused GEMM epilogue.
    x1 = linear_residual_layernorm(attn, p["wo_w"], p["wo_b"], xf,
                                   p["ln1_g"], p["ln1_b"])

    # FFN: fc1 + bias + ReLU fused; fc2 + residual + LayerNorm fused.
    h = linear(x1, p["fc1_w"], p["fc1_b"], activation="relu",
               out_dtype=jnp.bfloat16)
    x2 = linear_residual_layernorm(h, p["fc2_w"], p["fc2_b"], x1,
                                   p["ln2_g"], p["ln2_b"])
    return x2.reshape(B, S, D)


def decoder_only_forward(params, tgt, num_heads):
    B, S = tgt.shape
    # TODO(synk): embedding gather + positional encoding left to XLA (no clean
    # Pallas gather at this scale); dropout is identity at inference.
    x = params["embedding"][tgt] + params["pe"][:S][None, :, :]   # f32 (B,S,D)
    x = x.astype(jnp.bfloat16)
    for layer_p in params["layers"]:
        x = decoder_layer_forward(layer_p, x, num_heads)
    D = x.shape[-1]
    # Final vocab projection: tiled over N (vocab), weight tiles streamed.
    logits = linear(x.reshape(B * S, D), params["fc_w"], params["fc_b"],
                    out_dtype=jnp.float32, tn=1024)
    return logits.reshape(B, S, -1)


# ----------------------------------------------------------------------------
# Deterministic parameter initialization (synthetic — no checkpoint load)
# ----------------------------------------------------------------------------
def init_params(key, vocab_size, d_model, d_ff, num_layers, max_seq_len):
    def dense(k, fan_in, fan_out):
        kw, kb = jax.random.split(k)
        w = (jax.random.normal(kw, (fan_in, fan_out), jnp.float32) * 0.02)
        b = jax.random.normal(kb, (fan_out,), jnp.float32) * 0.02
        return w.astype(jnp.bfloat16), b            # weights bf16, bias f32

    keys = jax.random.split(key, num_layers + 2)
    params = {
        "embedding": jax.random.normal(
            keys[0], (vocab_size, d_model), jnp.float32) * 0.02,
        "pe": positional_encoding(max_seq_len, d_model),
        "layers": [],
    }
    for i in range(num_layers):
        lk = jax.random.split(keys[1 + i], 6)
        wq_w, wq_b = dense(lk[0], d_model, d_model)
        wk_w, wk_b = dense(lk[1], d_model, d_model)
        wv_w, wv_b = dense(lk[2], d_model, d_model)
        wo_w, wo_b = dense(lk[3], d_model, d_model)
        fc1_w, fc1_b = dense(lk[4], d_model, d_ff)
        fc2_w, fc2_b = dense(lk[5], d_ff, d_model)
        params["layers"].append(
            {
                # fused QKV weight (D, 3D) and bias (3D,)
                "wqkv_w": jnp.concatenate([wq_w, wk_w, wv_w], axis=1),
                "wqkv_b": jnp.concatenate([wq_b, wk_b, wv_b], axis=0),
                "wo_w": wo_w, "wo_b": wo_b,
                "fc1_w": fc1_w, "fc1_b": fc1_b,
                "fc2_w": fc2_w, "fc2_b": fc2_b,
                "ln1_g": jnp.ones((d_model,), jnp.float32),
                "ln1_b": jnp.zeros((d_model,), jnp.float32),
                "ln2_g": jnp.ones((d_model,), jnp.float32),
                "ln2_b": jnp.zeros((d_model,), jnp.float32),
            }
        )
    fc_w, fc_b = dense(keys[-1], d_model, vocab_size)
    params["fc_w"] = fc_w
    params["fc_b"] = fc_b
    return params


# ----------------------------------------------------------------------------
if __name__ == "__main__":
    # Small shapes consistent with the module's forward.
    batch_size = 2
    seq_len = 8
    d_model = 32
    num_heads = 4
    d_ff = 32
    num_layers = 2
    max_seq_length = 16
    vocab_size = 64

    key = jax.random.PRNGKey(0)
    pkey, tkey = jax.random.split(key)

    params = init_params(pkey, vocab_size, d_model, d_ff, num_layers, max_seq_length)
    tgt = jax.random.randint(tkey, (batch_size, seq_len), 0, vocab_size, dtype=jnp.int32)

    logits = decoder_only_forward(params, tgt, num_heads)
    logits = jax.block_until_ready(logits)

    assert logits.shape == (batch_size, seq_len, vocab_size)
    assert jnp.all(jnp.isfinite(logits))
    print("KERNEL_OK")
</pallas_src>

<mosaic_0001>
module attributes {stable_mosaic.version = 11 : i64} {
  func.func @_matmul_kernel(%arg0: i32, %arg1: i32, %arg2: i32, %arg3: memref<16x32xbf16, #tpu.memory_space<vmem>>, %arg4: memref<32x96xbf16, #tpu.memory_space<vmem>>, %arg5: memref<1x96xf32, #tpu.memory_space<vmem>>, %arg6: memref<16x96xbf16, #tpu.memory_space<vmem>>, %arg7: memref<16x96xf32, #tpu.memory_space<vmem>>) attributes {dimension_semantics = [#tpu.dimension_semantics<parallel>, #tpu.dimension_semantics<parallel>, #tpu.dimension_semantics<arbitrary>], iteration_bounds = array<i64: 1, 1, 1>, scalar_prefetch = 0 : i64, scratch_operands = 1 : i64, tpu.core_type = #tpu.core_type<tc>, window_params = [{transform_indices = @transform_0, window_bounds = array<i64: 16, 32>}, {transform_indices = @transform_1, window_bounds = array<i64: 32, 96>}, {transform_indices = @transform_2, window_bounds = array<i64: 1, 96>}, {transform_indices = @transform_3, window_bounds = array<i64: 16, 96>}]} {
    %c0_i32 = arith.constant 0 : i32
    %0 = arith.cmpi eq, %arg2, %c0_i32 : i32
    %1 = arith.extui %0 : i1 to i32
    %c0_i32_0 = arith.constant 0 : i32
    %2 = arith.cmpi ne, %1, %c0_i32_0 : i32
    scf.if %2 {
      %cst_10 = arith.constant 0.000000e+00 : f32
      %12 = vector.broadcast %cst_10 : f32 to vector<16x96xf32>
      %c0_11 = arith.constant 0 : index
      %c0_12 = arith.constant 0 : index
      %13 = vector.load %arg7[%c0_11, %c0_12] : memref<16x96xf32, #tpu.memory_space<vmem>>, vector<16x96xf32>
      tpu.vector_store %arg7[%c0_11, %c0_12], %12 {strides = array<i32>} : memref<16x96xf32, #tpu.memory_space<vmem>>, vector<16x96xf32>,
    } else {
    }
    %c0 = arith.constant 0 : index
    %c0_1 = arith.constant 0 : index
    %3 = vector.load %arg7[%c0, %c0_1] : memref<16x96xf32, #tpu.memory_space<vmem>>, vector<16x96xf32>
    %c0_2 = arith.constant 0 : index
    %c0_3 = arith.constant 0 : index
    %4 = vector.load %arg3[%c0_2, %c0_3] : memref<16x32xbf16, #tpu.memory_space<vmem>>, vector<16x32xbf16>
    %c0_4 = arith.constant 0 : index
    %c0_5 = arith.constant 0 : index
    %5 = vector.load %arg4[%c0_4, %c0_5] : memref<32x96xbf16, #tpu.memory_space<vmem>>, vector<32x96xbf16>
    %cst = arith.constant dense<0.000000e+00> : vector<16x96xf32>
    %6 = tpu.matmul %4, %5, %cst {dimension_numbers = #tpu.dot_dimension_numbers<[1], [0], [0], [1], [0, 0, 1, 1], [], []>} : vector<16x32xbf16>, vector<32x96xbf16>, vector<16x96xf32> -> vector<16x96xf32>
    %7 = arith.addf %3, %6 : vector<16x96xf32>
    %c0_6 = arith.constant 0 : index
    %c0_7 = arith.constant 0 : index
    %8 = vector.load %arg7[%c0_6, %c0_7] : memref<16x96xf32, #tpu.memory_space<vmem>>, vector<16x96xf32>
    tpu.vector_store %arg7[%c0_6, %c0_7], %7 {strides = array<i32>} : memref<16x96xf32, #tpu.memory_space<vmem>>, vector<16x96xf32>,
    %c0_i32_8 = arith.constant 0 : i32
    %9 = arith.cmpi eq, %arg2, %c0_i32_8 : i32
    %10 = arith.extui %9 : i1 to i32
    %c0_i32_9 = arith.constant 0 : i32
    %11 = arith.cmpi ne, %10, %c0_i32_9 : i32
    scf.if %11 {
      %c0_10 = arith.constant 0 : index
      %c0_11 = arith.constant 0 : index
      %12 = vector.load %arg7[%c0_10, %c0_11] : memref<16x96xf32, #tpu.memory_space<vmem>>, vector<16x96xf32>
      %c0_12 = arith.constant 0 : index
      %c0_13 = arith.constant 0 : index
      %13 = vector.load %arg5[%c0_12, %c0_13] : memref<1x96xf32, #tpu.memory_space<vmem>>, vector<1x96xf32>
      %14 = vector.broadcast %13 : vector<1x96xf32> to vector<16x96xf32>
      %15 = arith.addf %12, %14 : vector<16x96xf32>
      %16 = arith.truncf %15 : vector<16x96xf32> to vector<16x96xbf16>
      %c0_14 = arith.constant 0 : index
      %c0_15 = arith.constant 0 : index
      %17 = vector.load %arg6[%c0_14, %c0_15] : memref<16x96xbf16, #tpu.memory_space<vmem>>, vector<16x96xbf16>
      tpu.vector_store %arg6[%c0_14, %c0_15], %16 {strides = array<i32>} : memref<16x96xbf16, #tpu.memory_space<vmem>>, vector<16x96xbf16>,
    } else {
    }
    return
  }
  func.func @transform_0(%arg0: i32, %arg1: i32, %arg2: i32) -> (i32, i32) {
    %c0_i32 = arith.constant 0 : i32
    return %arg0, %arg2 : i32, i32
  }
  func.func @transform_1(%arg0: i32, %arg1: i32, %arg2: i32) -> (i32, i32) {
    %c0_i32 = arith.constant 0 : i32
    return %arg2, %arg1 : i32, i32
  }
  func.func @transform_2(%arg0: i32, %arg1: i32, %arg2: i32) -> (i32, i32) {
    %c0_i32 = arith.constant 0 : i32
    %c0_i32_0 = arith.constant 0 : i32
    return %c0_i32, %arg1 : i32, i32
  }
  func.func @transform_3(%arg0: i32, %arg1: i32, %arg2: i32) -> (i32, i32) {
    %c0_i32 = arith.constant 0 : i32
    return %arg0, %arg1 : i32, i32
  }
}

</mosaic_0001>

<llo_original>
// kernel: tpu_custom_call.1
$region0: #{tpu_custom_call.1}
  #allocation0 [shape = 'u32[]', space=smem, size = 0x4, offset = 0x4, fixed_abs, tag = 'smem constant byte address 0x4 - core index']
  #allocation1 [shape = 'u32[144,128]{1,0:T(1,128)}', space=vmem, size = 0x12000, scoped, tag = 'internal scratch']
  #allocation2 [shape = 'f32[16,96]{1,0:T(8,128)}', space=vmem, size = 0x2000, scoped, tag = 'scratch operand']
  %s0 = inlined_call_operand.hbm [shape: bf16[16,32], index: 0, kind: input, shape index: {}]
  %s1 = inlined_call_operand.hbm [shape: bf16[32,96], index: 1, kind: input, shape index: {}]
  %s2 = inlined_call_operand.vmem [shape: f32[1,96], index: 2, kind: input, shape index: {}]
  %s3 = inlined_call_operand.hbm [shape: bf16[16,96], index: 3, kind: output, shape index: {}]
  %s4 = sld [smem:[#allocation0]]
  $region38: #{tpu_custom_call.1} parent=0
    _
  %s6 = ssub.s32 1, %s4
  %s7 = scalar_select 0, %s6, %s4
  $region1: #{tpu_custom_call.1} parent=0
    #allocation3 [shape = 'u8[4096]{0}', space=vmem, size = 0x1000, scoped, tag = 'input window, operand 0, single buffered']
    #allocation4 [shape = 's32[1]{0}', space=sflag, size = 0x4, scoped, tag = 'scoped memory for tpu_custom_call.1']
    #allocation5 [shape = 's32[1]{0}', space=sflag, size = 0x4, scoped, tag = 'scoped memory for tpu_custom_call.1']
    #allocation6 [shape = 'u8[8192]{0}', space=vmem, size = 0x2000, scoped, tag = 'input window, operand 1, single buffered']
    #allocation7 [shape = 's32[1]{0}', space=sflag, size = 0x4, scoped, tag = 'scoped memory for tpu_custom_call.1']
    #allocation8 [shape = 'u8[4096]{0}', space=vmem, size = 0x1000, scoped, tag = 'output window, operand 0, single buffered']
    %8 = vsyncpa [#allocation4], 0
    %9 = vsyncpa [#allocation7], 0
    %10 = vsyncpa [#allocation5], 0
    // Predicated region
    $region2: #{tpu_custom_call.1} parent=1 // pred_check
      _
    $region3: #{tpu_custom_call.1} parent=1 // pred_check_branch
      %12 = sbr.rel (0) target = $region5
    $region4: #{tpu_custom_call.1} parent=1 // pred_region
      %s14 = ssub.s32 128, 128
      %15 = vsyncadd [#allocation4], %s14
      %s16 = sshll.u32 [#allocation3], 4
      %s17 = int_to_ptr.vmem [resolvable:$true] %s16
      %22 = dma.hbm_to_vmem [thread:$0]  %s0, 128, %s17, [#allocation4], 64, 64, 4
    $region5: #{tpu_custom_call.1} parent=1 // pred_fallthru
      _
    // Predicated region
    $region6: #{tpu_custom_call.1} parent=1 // pred_check
      _
    $region7: #{tpu_custom_call.1} parent=1 // pred_check_branch
      %24 = sbr.rel (0) target = $region9
    $region8: #{tpu_custom_call.1} parent=1 // pred_region
      %s26 = ssub.s32 256, 256
      %27 = vsyncadd [#allocation7], %s26
      %s28 = sshll.u32 [#allocation6], 4
      %s29 = int_to_ptr.vmem [resolvable:$true] %s28
      %34 = dma.hbm_to_vmem [thread:$0]  %s1, 256, %s29, [#allocation7], 64, 64, 4
    $region9: #{tpu_custom_call.1} parent=1 // pred_fallthru
      _
    // Predicated region
    $region10: #{tpu_custom_call.1} parent=1 // pred_check
      _
    $region11: #{tpu_custom_call.1} parent=1 // pred_check_branch
      %36 = sbr.rel (0) target = $region13
    $region12: #{tpu_custom_call.1} parent=1 // pred_region
      _
    $region13: #{tpu_custom_call.1} parent=1 // pred_fallthru
      _
    // Predicated region
    $region14: #{tpu_custom_call.1} parent=1 // pred_check
      _
    $region15: #{tpu_custom_call.1} parent=1 // pred_check_branch
      %38 = sbr.rel (0) target = $region17
    $region16: #{tpu_custom_call.1} parent=1 // pred_region
      %39 = dma.done [#allocation4], 128
    $region17: #{tpu_custom_call.1} parent=1 // pred_fallthru
      _
    // Predicated region
    $region18: #{tpu_custom_call.1} parent=1 // pred_check
      _
    $region19: #{tpu_custom_call.1} parent=1 // pred_check_branch
      %41 = sbr.rel (0) target = $region21
    $region20: #{tpu_custom_call.1} parent=1 // pred_region
      %42 = dma.done [#allocation7], 256
    $region21: #{tpu_custom_call.1} parent=1 // pred_fallthru
      _
    %p44 = scmp.eq.s32.totalorder 0, 0
    // Predicated region
    $region22: #{tpu_custom_call.1} parent=1 // pred_check
      %p45 = pneg %p44
    $region23: #{tpu_custom_call.1} parent=1 // pred_check_branch
      %47 = sbr.rel (%p45) target = $region25
    $region24: #{tpu_custom_call.1} parent=1 // pred_region
      %vm48 = vcmask 785408
      %49 = vst.msk [vmem:[#allocation2] sm:$0xff] %vm48, 0.0
      %50 = vst.msk [vmem:[#allocation2 + $0x8] sm:$0xff] %vm48, 0.0
    $region25: #{tpu_custom_call.1} parent=1 // pred_fallthru
      _
    %v51 = vld [vmem:[#allocation2] sm:$0xff]
    %v52 = vld [vmem:[#allocation2 + $0x8] sm:$0xff]
    %v53 = vld [vmem:[#allocation3] sm:$0xf]
    %v54 = vld [vmem:[#allocation3 + $0x4] sm:$0xf]
    %v55 = vld [vmem:[#allocation6] sm:$0xf]
    %v56 = vld [vmem:[#allocation6 + $0x4] sm:$0xf]
    %v57 = vld [vmem:[#allocation6 + $0x8] sm:$0xf]
    %v58 = vld [vmem:[#allocation6 + $0xc] sm:$0xf]
    %v61 = vunpack.c.l.b16 %v53
    %v62 = vunpack.c.l.b16 %v54
    %v63 = vpack.c.b16 %v62, %v61
    %v68 = vunpack.c.l.b16 %v55
    %v69 = vunpack.c.l.b16 %v56
    %v70 = vunpack.c.l.b16 %v57
    %v71 = vunpack.c.l.b16 %v58
    %v72 = vpack.c.b16 %v69, %v68
    %v73 = vpack.c.b16 %v71, %v70
    %vm76 = vcmask 261120
    %v78 = vsel %vm76, %v63, 0
    %80 = vmatprep.subr.bf16.mxu0 0
    %81 = vmatpush1.bf16.msra.mxu0 %v72
    %82 = vmatprep.subr.bf16.mxu0 0
    %83 = vmatpush1.bf16.msra.mxu0 %v73
    %84 = vmatprep.subr.bf16.mxu0 0
    %85 = vmatpush1.bf16.msra.mxu0 0
    %86 = vmatprep.subr.bf16.mxu0 0
    %87 = vmatpush1.bf16.msra.mxu0 0
    %88 = vmatprep.subr.bf16.mxu0 0
    %89 = vmatpush1.bf16.msra.mxu0 0
    %90 = vmatprep.subr.bf16.mxu0 0
    %91 = vmatpush1.bf16.msra.mxu0 0
    %92 = vmatprep.subr.bf16.mxu0 0
    %93 = vmatpush1.bf16.msra.mxu0 0
    %94 = vmatprep.subr.bf16.mxu0 0
    %95 = vmatpush1.bf16.msra.mxu0 0
    %96 = vmatprep.subr.bf16.mxu0 0
    %97 = vmatpush1.bf16.msra.mxu0 0
    %98 = vmatprep.subr.bf16.mxu0 0
    %99 = vmatpush1.bf16.msra.mxu0 0
    %100 = vmatprep.subr.bf16.mxu0 0
    %101 = vmatpush1.bf16.msra.mxu0 0
    %102 = vmatprep.subr.bf16.mxu0 0
    %103 = vmatpush1.bf16.msra.mxu0 0
    %104 = vmatprep.subr.bf16.mxu0 0
    %105 = vmatpush1.bf16.msra.mxu0 0
    %106 = vmatprep.subr.bf16.mxu0 0
    %107 = vmatpush1.bf16.msra.mxu0 0
    %108 = vmatprep.subr.bf16.mxu0 0
    %109 = vmatpush1.bf16.msra.mxu0 0
    %110 = vmatprep.subr.bf16.mxu0 0
    %111 = vmatpush1.bf16.msra.mxu0 0
    %112 = vmatprep.mubr.bf16.mxu0 0
    %113 = vmatmul.mubr.bf16.gmra.mrb[0].mxu0 %v78
    %v114 = vpop.f32.mrb[0].mxu0
    %v115 = vadd.f32 0.0, %v114
    %v116 = vpop.f32.mrb[0].mxu0
    %v117 = vpop.f32.mrb[0].mxu0
    %v118 = vadd.f32 0.0, %v117
    %v119 = vpop.f32.mrb[0].mxu0
    %120 = vdwg.mxu0
    %v121 = vadd.f32 %v51, %v115
    %v122 = vadd.f32 %v52, %v118
    %vm123 = vcmask 785408
    %124 = vst.msk [vmem:[#allocation2] sm:$0xff] %vm123, %v121
    %125 = vst.msk [vmem:[#allocation2 + $0x8] sm:$0xff] %vm123, %v122
    // Predicated region
    $region26: #{tpu_custom_call.1} parent=1 // pred_check
      %p126 = pneg %p44
    $region27: #{tpu_custom_call.1} parent=1 // pred_check_branch
      %128 = sbr.rel (%p126) target = $region29
    $region28: #{tpu_custom_call.1} parent=1 // pred_region
      %v129 = vld [vmem:[#allocation2] sm:$0xff]
      %v130 = vld [vmem:[#allocation2 + $0x8] sm:$0xff]
      %v131 = vld [vmem:[%s2] sm:$0x1]
      %v133 = vlaneseq
      %v134 = vshrl.u32 %v133, 7
      %v135 = vsub.s32 0, %v134
      %v136 = vrot.slane %v131, %v135
      %v138 = vadd.f32 %v129, %v136
      %v139 = vadd.f32 %v130, %v136
      %v140 = vpack.c.bf16 %v139, %v138
      %v142 = vunpack.c.l.b16 %v140
      %v143 = vunpack.c.h.b16 %v140
      %v144 = vpack.c.b16 %v142, %v142
      %v145 = vpack.c.b16 %v143, %v143
      %vm148 = vcmask 781312
      %149 = vst.msk [vmem:[#allocation8] sm:$0xf] %vm148, %v144
      %150 = vst.msk [vmem:[#allocation8 + $0x4] sm:$0xf] %vm148, %v145
    $region29: #{tpu_custom_call.1} parent=1 // pred_fallthru
      _
    // Predicated region
    $region30: #{tpu_custom_call.1} parent=1 // pred_check
      _
    $region31: #{tpu_custom_call.1} parent=1 // pred_check_branch
      %152 = sbr.rel (0) target = $region33
    $region32: #{tpu_custom_call.1} parent=1 // pred_region
      %s154 = ssub.s32 128, 128
      %155 = vsyncadd [#allocation5], %s154
      %s156 = sshll.u32 [#allocation8], 4
      %s157 = int_to_ptr.vmem [resolvable:$true] %s156
      %162 = dma.vmem_to_hbm [thread:$0]  %s157, 128, %s3, [#allocation5], 64, 64, 4
    $region33: #{tpu_custom_call.1} parent=1 // pred_fallthru
      _
    // Predicated region
    $region34: #{tpu_custom_call.1} parent=1 // pred_check
      _
    $region35: #{tpu_custom_call.1} parent=1 // pred_check_branch
      %164 = sbr.rel (0) target = $region37
    $region36: #{tpu_custom_call.1} parent=1 // pred_region
      %165 = dma.done [#allocation5], 128
    $region37: #{tpu_custom_call.1} parent=1 // pred_fallthru
      _
    %166 = vsyncpa [#allocation4], 1
    %167 = vsyncpa [#allocation7], 1
    %168 = vsyncpa [#allocation5], 1

</llo_original>
